<compile_context>
chip_gen: v5e
topology: v5e:2x2
jax: 0.10.0
libtpu: 0.0.40
codegen_flags: <defaults>
</compile_context>

<pallas_src>
import numpy as np
import jax
import jax.numpy as jnp
from jax.experimental import pallas as pl
from jax.experimental.pallas import tpu as pltpu


# ----------------------------------------------------------------------------- helpers


def _build_relative_position_index(window_size):
    """Replicates the buffer construction in RelativePositionBias.__init__ (numpy)."""
    Wh, Ww = window_size
    num_relative_distance = (2 * Wh - 1) * (2 * Ww - 1) + 3

    coords_h = np.arange(Wh)
    coords_w = np.arange(Ww)
    coords = np.stack(np.meshgrid(coords_h, coords_w, indexing="ij"))         # (2, Wh, Ww)
    coords_flatten = coords.reshape(2, -1)                                     # (2, Wh*Ww)
    relative_coords = coords_flatten[:, :, None] - coords_flatten[:, None, :]  # (2, N, N)
    relative_coords = relative_coords.transpose(1, 2, 0).copy()                # (N, N, 2)
    relative_coords[:, :, 0] += Wh - 1
    relative_coords[:, :, 1] += Ww - 1
    relative_coords[:, :, 0] *= 2 * Ww - 1

    rpi = np.zeros((Wh * Ww + 1, Wh * Ww + 1), dtype=np.int64)
    rpi[1:, 1:] = relative_coords.sum(-1)
    rpi[0, 0:] = num_relative_distance - 3
    rpi[0:, 0] = num_relative_distance - 2
    rpi[0, 0] = num_relative_distance - 1
    return rpi.astype(np.int32), num_relative_distance


def _round_up(x, m):
    return ((x + m - 1) // m) * m


def _cdiv(a, b):
    return (a + b - 1) // b


# Max lanes of the flattened (L, L) axis handled per grid step.  With the bf16
# one-hot, the (D, tile) temp for real BEiT windows (14x14 -> D=732) is ~12 MiB
# at tile=8192, fitting every generation's scoped VMEM (incl. v7x's 64 MiB/TC).
_LL_TILE_MAX = 8192


def _choose_ll_tiling(LL):
    """Pick a lane-dense 128-aligned tile; even tile count (>1) for v7x megacore."""
    ll_128 = _round_up(LL, 128)
    if ll_128 <= _LL_TILE_MAX:
        return ll_128, ll_128, 1
    n_tiles = _cdiv(ll_128, _LL_TILE_MAX)
    if n_tiles % 2:
        n_tiles += 1                      # balanced split across two TensorCores
    ll_tile = _round_up(_cdiv(ll_128, n_tiles), 128)
    ll_pad = ll_tile * n_tiles
    return ll_pad, ll_tile, n_tiles


def _split_f32_to_3xbf16(x):
    """Exact split: hi + mid + lo == x (f32) for the three bf16 chunks."""
    hi = x.astype(jnp.bfloat16)
    r1 = x - hi.astype(jnp.float32)
    mid = r1.astype(jnp.bfloat16)
    r2 = r1 - mid.astype(jnp.float32)
    lo = r2.astype(jnp.bfloat16)           # r2 has <= 8 significant bits -> exact
    return hi, mid, lo


# ----------------------------------------------------------------------------- kernel


def _bias_gather_kernel(table3_ref, idx_ref, out_ref):
    """table3_ref: (3*M, D) bf16, idx_ref: (1, T) i32, out_ref: (M, T) f32.

    out[m, t] = table[m, idx[t]], realized as onehot matmuls on the MXU:
        prod = table3 @ onehot            (bf16 x bf16 -> f32 accumulate)
        out  = prod_hi + prod_mid + prod_lo   (exact f32 reconstruction)
    The one-hot (0/1) is exactly representable in bf16 and each column selects a
    single row, so every chunk's gather is exact; the 3-chunk sum recovers the
    full 24-bit f32 mantissa -> bit-identical to the PyTorch f32 gather.
    """
    M = out_ref.shape[0]
    D = table3_ref.shape[1]
    T = idx_ref.shape[1]

    idx = idx_ref[...]                                          # (1, T) int32
    iota_d = jax.lax.broadcasted_iota(jnp.int32, (D, T), 0)     # (D, T)
    onehot = (iota_d == idx).astype(jnp.bfloat16)               # (D, T) bf16

    prod = jnp.dot(table3_ref[...], onehot,
                   preferred_element_type=jnp.float32)          # (3*M, T) f32
    # Static, sublane-aligned slices (M is a multiple of 8).
    out_ref[...] = prod[0:M, :] + prod[M:2 * M, :] + prod[2 * M:3 * M, :]


# ----------------------------------------------------------------------------- wrappers


def relative_position_bias_stacked(tables, rel_pos_index, window_size):
    """Batched forward for `num_tables` RelativePositionBias modules sharing a window.

    tables:        (B, num_relative_distance, num_heads) float32
    rel_pos_index: (Wh*Ww+1, Wh*Ww+1) int32
    returns:       (B, num_heads, L, L) float32   with L = Wh*Ww + 1
    """
    Wh, Ww = window_size
    L = Wh * Ww + 1
    LL = L * L
    B, D, H = tables.shape
    Hp = _round_up(H, 8)          # sublane-dense output rows
    M = B * Hp

    # --- parameter / index prep (glue).  Depends only on the parameters and the
    #     static index buffer; callers should cache it per parameter update.
    t = jnp.transpose(tables, (0, 2, 1)).astype(jnp.float32)        # (B, H, D)
    t = jnp.pad(t, ((0, 0), (0, Hp - H), (0, 0))).reshape(M, D)     # (M, D)
    hi, mid, lo = _split_f32_to_3xbf16(t)
    table3 = jnp.concatenate([hi, mid, lo], axis=0)                 # (3M, D) bf16

    ll_pad, ll_tile, n_tiles = _choose_ll_tiling(LL)
    idx_flat = rel_pos_index.reshape(-1).astype(jnp.int32)
    # Pad with an in-range index (0); padded columns are discarded below.
    idx_flat = jnp.pad(idx_flat, (0, ll_pad - LL)).reshape(1, ll_pad)

    out = pl.pallas_call(
        _bias_gather_kernel,
        out_shape=jax.ShapeDtypeStruct((M, ll_pad), jnp.float32),
        grid=(n_tiles,),
        in_specs=[
            pl.BlockSpec((3 * M, D), lambda i: (0, 0)),       # stacked table, resident
            pl.BlockSpec((1, ll_tile), lambda i: (0, i)),     # idx tile
        ],
        out_specs=pl.BlockSpec((M, ll_tile), lambda i: (0, i)),  # lane-dense out tile
        compiler_params=pltpu.CompilerParams(
            dimension_semantics=("parallel",),                # megacore split on v7x
            vmem_limit_bytes=48 * 1024 * 1024,                # bf16 one-hot ~12 MiB max
        ),
    )(table3, idx_flat)

    # Drop lane padding and head padding, restore (B, H, L, L).
    return out[:, :LL].reshape(B, Hp, L, L)[:, :H]


def relative_position_bias(table, rel_pos_index, window_size):
    """Forward pass of a single RelativePositionBias module.

    table:          (num_relative_distance, num_heads) float32
    rel_pos_index:  (Wh*Ww+1, Wh*Ww+1) int32
    returns:        (num_heads, Wh*Ww+1, Wh*Ww+1) float32
    """
    # TODO(synk): in a real model, stack the tables of all blocks sharing this
    # window into one relative_position_bias_stacked call (reuses the one-hot and
    # fills MXU rows), and cache the result — it only changes on parameter updates.
    return relative_position_bias_stacked(table[None], rel_pos_index, window_size)[0]


# ----------------------------------------------------------------------------- test


def _reference_bias(table, rel_pos_index, window_size, num_heads):
    L = window_size[0] * window_size[1] + 1
    ref = jnp.take(table, rel_pos_index.reshape(-1), axis=0)     # (L*L, H)
    return ref.reshape(L, L, num_heads).transpose(2, 0, 1)       # (H, L, L)


if __name__ == "__main__":
    key = jax.random.PRNGKey(0)

    # --- Check 1: small module-consistent shapes (4x4 window, 8 heads), single table.
    window_size = (4, 4)
    num_heads = 8
    rpi_np, nrd = _build_relative_position_index(window_size)
    rel_pos_index = jnp.asarray(rpi_np)                          # (17, 17) int32

    key, k1 = jax.random.split(key)
    table = jax.random.normal(k1, (nrd, num_heads), dtype=jnp.float32) * 0.02

    out = relative_position_bias(table, rel_pos_index, window_size)
    out = jax.block_until_ready(out)

    L = window_size[0] * window_size[1] + 1
    ref = _reference_bias(table, rel_pos_index, window_size, num_heads)
    assert out.shape == (num_heads, L, L), out.shape
    np.testing.assert_allclose(np.asarray(out), np.asarray(ref), rtol=1e-7, atol=1e-9)

    # --- Check 2: stacked tables (B=2), H=12 (-> padded to 16), multi-tile LL axis.
    window_size2 = (10, 10)                                      # LL = 10201 -> 2 tiles
    num_heads2 = 12
    rpi2_np, nrd2 = _build_relative_position_index(window_size2)
    rel_pos_index2 = jnp.asarray(rpi2_np)

    key, k2 = jax.random.split(key)
    tables2 = jax.random.normal(k2, (2, nrd2, num_heads2), dtype=jnp.float32) * 0.02

    out2 = relative_position_bias_stacked(tables2, rel_pos_index2, window_size2)
    out2 = jax.block_until_ready(out2)

    L2 = window_size2[0] * window_size2[1] + 1
    assert out2.shape == (2, num_heads2, L2, L2), out2.shape
    for b in range(2):
        ref2 = _reference_bias(tables2[b], rel_pos_index2, window_size2, num_heads2)
        np.testing.assert_allclose(np.asarray(out2[b]), np.asarray(ref2),
                                   rtol=1e-7, atol=1e-9)

    print("KERNEL_OK")
</pallas_src>

<mosaic_0001>
module attributes {stable_mosaic.version = 11 : i64} {
  func.func @_bias_gather_kernel(%arg0: i32, %arg1: memref<24x52xbf16, #tpu.memory_space<vmem>>, %arg2: memref<1x384xi32, #tpu.memory_space<vmem>>, %arg3: memref<8x384xf32, #tpu.memory_space<vmem>>) attributes {dimension_semantics = [#tpu.dimension_semantics<parallel>], iteration_bounds = array<i64: 1>, scalar_prefetch = 0 : i64, scratch_operands = 0 : i64, tpu.core_type = #tpu.core_type<tc>, window_params = [{pipeline_mode = #tpu.pipeline_mode<synchronous>, transform_indices = @transform_0, window_bounds = array<i64: 24, 52>}, {transform_indices = @transform_1, window_bounds = array<i64: 1, 384>}, {transform_indices = @transform_2, window_bounds = array<i64: 8, 384>}]} {
    %c0 = arith.constant 0 : index
    %c0_0 = arith.constant 0 : index
    %0 = vector.load %arg2[%c0, %c0_0] : memref<1x384xi32, #tpu.memory_space<vmem>>, vector<1x384xi32>
    %1 = tpu.iota {dimensions = array<i32: 0>} : vector<52x384xi32>
    %2 = vector.broadcast %0 : vector<1x384xi32> to vector<52x384xi32>
    %3 = arith.cmpi eq, %1, %2 : vector<52x384xi32>
    %4 = arith.extui %3 : vector<52x384xi1> to vector<52x384xi32>
    %5 = arith.sitofp %4 : vector<52x384xi32> to vector<52x384xf32>
    %6 = arith.truncf %5 : vector<52x384xf32> to vector<52x384xbf16>
    %c0_1 = arith.constant 0 : index
    %c0_2 = arith.constant 0 : index
    %7 = vector.load %arg1[%c0_1, %c0_2] : memref<24x52xbf16, #tpu.memory_space<vmem>>, vector<24x52xbf16>
    %cst = arith.constant dense<0.000000e+00> : vector<24x384xf32>
    %8 = tpu.matmul %7, %6, %cst {dimension_numbers = #tpu.dot_dimension_numbers<[1], [0], [0], [1], [0, 0, 1, 1], [], []>} : vector<24x52xbf16>, vector<52x384xbf16>, vector<24x384xf32> -> vector<24x384xf32>
    %9 = vector.extract_strided_slice %8 {offsets = [0, 0], sizes = [8, 384], strides = [1, 1]} : vector<24x384xf32> to vector<8x384xf32>
    %10 = vector.extract_strided_slice %8 {offsets = [8, 0], sizes = [8, 384], strides = [1, 1]} : vector<24x384xf32> to vector<8x384xf32>
    %11 = arith.addf %9, %10 : vector<8x384xf32>
    %12 = vector.extract_strided_slice %8 {offsets = [16, 0], sizes = [8, 384], strides = [1, 1]} : vector<24x384xf32> to vector<8x384xf32>
    %13 = arith.addf %11, %12 : vector<8x384xf32>
    %c0_3 = arith.constant 0 : index
    %c0_4 = arith.constant 0 : index
    %14 = vector.load %arg3[%c0_3, %c0_4] : memref<8x384xf32, #tpu.memory_space<vmem>>, vector<8x384xf32>
    tpu.vector_store %arg3[%c0_3, %c0_4], %13 {strides = array<i32>} : memref<8x384xf32, #tpu.memory_space<vmem>>, vector<8x384xf32>,
    return
  }
  func.func @transform_0(%arg0: i32) -> (i32, i32) {
    %c0_i32 = arith.constant 0 : i32
    %c0_i32_0 = arith.constant 0 : i32
    %c0_i32_1 = arith.constant 0 : i32
    return %c0_i32, %c0_i32_0 : i32, i32
  }
  func.func @transform_1(%arg0: i32) -> (i32, i32) {
    %c0_i32 = arith.constant 0 : i32
    %c0_i32_0 = arith.constant 0 : i32
    return %c0_i32, %arg0 : i32, i32
  }
  func.func @transform_2(%arg0: i32) -> (i32, i32) {
    %c0_i32 = arith.constant 0 : i32
    %c0_i32_0 = arith.constant 0 : i32
    return %c0_i32, %arg0 : i32, i32
  }
}

</mosaic_0001>

<llo_original>
// kernel: tpu_custom_call.1
$region0: #{tpu_custom_call.1}
  #allocation0 [shape = 'u32[]', space=smem, size = 0x4, offset = 0x4, fixed_abs, tag = 'smem constant byte address 0x4 - core index']
  #allocation1 [shape = 'u32[72,128]{1,0:T(1,128)}', space=vmem, size = 0x9000, scoped, tag = 'internal scratch']
  %s0 = inlined_call_operand.hbm [shape: bf16[24,52], index: 0, kind: input, shape index: {}]
  %s1 = inlined_call_operand.hbm [shape: s32[1,384], index: 1, kind: input, shape index: {}]
  %s2 = inlined_call_operand.hbm [shape: f32[8,384], index: 2, kind: output, shape index: {}]
  %s3 = sld [smem:[#allocation0]]
  $region26: #{tpu_custom_call.1} parent=0
    _
  %s5 = ssub.s32 1, %s3
  %s6 = scalar_select 0, %s5, %s3
  $region1: #{tpu_custom_call.1} parent=0
    #allocation2 [shape = 'u8[6144]{0}', space=vmem, size = 0x1800, scoped, tag = 'input window, operand 0, single buffered']
    #allocation3 [shape = 's32[1]{0}', space=sflag, size = 0x4, scoped, tag = 'scoped memory for tpu_custom_call.1']
    #allocation4 [shape = 's32[1]{0}', space=sflag, size = 0x4, scoped, tag = 'scoped memory for tpu_custom_call.1']
    #allocation5 [shape = 'u8[1536]{0}', space=vmem, size = 0x800, scoped, tag = 'input window, operand 1, single buffered']
    #allocation6 [shape = 's32[1]{0}', space=sflag, size = 0x4, scoped, tag = 'scoped memory for tpu_custom_call.1']
    #allocation7 [shape = 'u8[12288]{0}', space=vmem, size = 0x3000, scoped, tag = 'output window, operand 0, single buffered']
    %7 = vsyncpa [#allocation3], 0
    %8 = vsyncpa [#allocation6], 0
    %9 = vsyncpa [#allocation4], 0
    // Predicated region
    $region2: #{tpu_custom_call.1} parent=1 // pred_check
      _
    $region3: #{tpu_custom_call.1} parent=1 // pred_check_branch
      %11 = sbr.rel (0) target = $region5
    $region4: #{tpu_custom_call.1} parent=1 // pred_region
      %13 = vsyncadd [#allocation3], 0
      %s14 = sshll.u32 %s0, 4
      %s15 = int_to_ptr.hbm [resolvable:$true] %s14
      %s16 = sshll.u32 [#allocation2], 4
      %s17 = int_to_ptr.vmem [resolvable:$true] %s16
      %22 = dma.hbm_to_vmem [thread:$0]  %s15, 192, %s17, [#allocation3], 64, 64, 4
    $region5: #{tpu_custom_call.1} parent=1 // pred_fallthru
      _
    // Predicated region
    $region6: #{tpu_custom_call.1} parent=1 // pred_check
      _
    $region7: #{tpu_custom_call.1} parent=1 // pred_check_branch
      %24 = sbr.rel (0) target = $region9
    $region8: #{tpu_custom_call.1} parent=1 // pred_region
      %26 = vsyncadd [#allocation6], 0
      %s28 = sshll.u32 %s1, 4
      %s29 = int_to_ptr.hbm [resolvable:$true] %s28
      %s30 = sshll.u32 [#allocation5], 4
      %s31 = int_to_ptr.vmem [resolvable:$true] %s30
      %33 = dma.hbm_to_vmem [thread:$0]  %s29, 48, %s31, [#allocation6]
    $region9: #{tpu_custom_call.1} parent=1 // pred_fallthru
      _
    // Predicated region
    $region10: #{tpu_custom_call.1} parent=1 // pred_check
      _
    $region11: #{tpu_custom_call.1} parent=1 // pred_check_branch
      %35 = sbr.rel (0) target = $region13
    $region12: #{tpu_custom_call.1} parent=1 // pred_region
      %37 = dma.done [#allocation3], 192
    $region13: #{tpu_custom_call.1} parent=1 // pred_fallthru
      _
    // Predicated region
    $region14: #{tpu_custom_call.1} parent=1 // pred_check
      _
    $region15: #{tpu_custom_call.1} parent=1 // pred_check_branch
      %39 = sbr.rel (0) target = $region17
    $region16: #{tpu_custom_call.1} parent=1 // pred_region
      %41 = dma.done [#allocation6], 48
    $region17: #{tpu_custom_call.1} parent=1 // pred_fallthru
      _
    %v43 = vld [vmem:[#allocation5] sm:$0x7]
    %v44 = vlaneseq
    %v45 = vshrl.u32 %v44, 7
    %v46 = vadd.s32 %v45, 8
    %v47 = vadd.s32 %v45, 16
    %v48 = vadd.s32 %v45, 24
    %v49 = vadd.s32 %v45, 32
    %v50 = vadd.s32 %v45, 40
    %v51 = vadd.s32 %v45, 48
    %v52 = vperm.slane %v43, 0
    %v53 = vperm.slane %v43, 1
    %v54 = vperm.slane %v43, 2
    %vm55 = vcmp.eq.s32.totalorder %v45, %v52
    %vm56 = vcmp.eq.s32.totalorder %v45, %v53
    %vm57 = vcmp.eq.s32.totalorder %v45, %v54
    %vm58 = vcmp.eq.s32.totalorder %v46, %v52
    %vm59 = vcmp.eq.s32.totalorder %v46, %v53
    %vm60 = vcmp.eq.s32.totalorder %v46, %v54
    %vm61 = vcmp.eq.s32.totalorder %v47, %v52
    %vm62 = vcmp.eq.s32.totalorder %v47, %v53
    %vm63 = vcmp.eq.s32.totalorder %v47, %v54
    %vm64 = vcmp.eq.s32.totalorder %v48, %v52
    %vm65 = vcmp.eq.s32.totalorder %v48, %v53
    %vm66 = vcmp.eq.s32.totalorder %v48, %v54
    %vm67 = vcmp.eq.s32.totalorder %v49, %v52
    %vm68 = vcmp.eq.s32.totalorder %v49, %v53
    %vm69 = vcmp.eq.s32.totalorder %v49, %v54
    %vm70 = vcmp.eq.s32.totalorder %v50, %v52
    %vm71 = vcmp.eq.s32.totalorder %v50, %v53
    %vm72 = vcmp.eq.s32.totalorder %v50, %v54
    %vm73 = vcmp.eq.s32.totalorder %v51, %v52
    %vm74 = vcmp.eq.s32.totalorder %v51, %v53
    %vm75 = vcmp.eq.s32.totalorder %v51, %v54
    %v76 = vsel %vm55, 1, 0
    %v77 = vsel %vm56, 1, 0
    %v78 = vsel %vm57, 1, 0
    %v79 = vsel %vm58, 1, 0
    %v80 = vsel %vm59, 1, 0
    %v81 = vsel %vm60, 1, 0
    %v82 = vsel %vm61, 1, 0
    %v83 = vsel %vm62, 1, 0
    %v84 = vsel %vm63, 1, 0
    %v85 = vsel %vm64, 1, 0
    %v86 = vsel %vm65, 1, 0
    %v87 = vsel %vm66, 1, 0
    %v88 = vsel %vm67, 1, 0
    %v89 = vsel %vm68, 1, 0
    %v90 = vsel %vm69, 1, 0
    %v91 = vsel %vm70, 1, 0
    %v92 = vsel %vm71, 1, 0
    %v93 = vsel %vm72, 1, 0
    %v94 = vsel %vm73, 1, 0
    %v95 = vsel %vm74, 1, 0
    %v96 = vsel %vm75, 1, 0
    %v97 = vcvt.s32.f32 %v76
    %v98 = vcvt.s32.f32 %v77
    %v99 = vcvt.s32.f32 %v78
    %v100 = vcvt.s32.f32 %v79
    %v101 = vcvt.s32.f32 %v80
    %v102 = vcvt.s32.f32 %v81
    %v103 = vcvt.s32.f32 %v82
    %v104 = vcvt.s32.f32 %v83
    %v105 = vcvt.s32.f32 %v84
    %v106 = vcvt.s32.f32 %v85
    %v107 = vcvt.s32.f32 %v86
    %v108 = vcvt.s32.f32 %v87
    %v109 = vcvt.s32.f32 %v88
    %v110 = vcvt.s32.f32 %v89
    %v111 = vcvt.s32.f32 %v90
    %v112 = vcvt.s32.f32 %v91
    %v113 = vcvt.s32.f32 %v92
    %v114 = vcvt.s32.f32 %v93
    %v115 = vcvt.s32.f32 %v94
    %v116 = vcvt.s32.f32 %v95
    %v117 = vcvt.s32.f32 %v96
    %v118 = vpack.c.bf16 %v100, %v97
    %v119 = vpack.c.bf16 %v101, %v98
    %v120 = vpack.c.bf16 %v102, %v99
    %v121 = vpack.c.bf16 %v106, %v103
    %v122 = vpack.c.bf16 %v107, %v104
    %v123 = vpack.c.bf16 %v108, %v105
    %v124 = vpack.c.bf16 %v112, %v109
    %v125 = vpack.c.bf16 %v113, %v110
    %v126 = vpack.c.bf16 %v114, %v111
    %v127 = vpack.c.bf16 %v115, %v115
    %v128 = vpack.c.bf16 %v116, %v116
    %v129 = vpack.c.bf16 %v117, %v117
    %v130 = vld [vmem:[#allocation2] sm:$0xf]
    %v131 = vld [vmem:[#allocation2 + $0x4] sm:$0xf]
    %v132 = vld [vmem:[#allocation2 + $0x8] sm:$0xf]
    %v136 = vunpack.c.l.b16 %v130
    %v137 = vunpack.c.l.b16 %v131
    %v138 = vunpack.c.l.b16 %v132
    %v139 = vpack.c.b16 %v137, %v136
    %v140 = vpack.c.b16 %v138, %v138
    %vm141 = vcmask 424960
    %v143 = vsel %vm141, %v139, 0
    %v146 = vsel %vm141, %v140, 0
    %vm148 = vcmask 1041408
    %v150 = vsel %vm148, %v127, 0
    %v153 = vsel %vm148, %v128, 0
    %v156 = vsel %vm148, %v129, 0
    %158 = vmatpush.bf16.msra.mxu0 0
    %159 = vmatpush.bf16.msra.mxu0 0
    %160 = vmatpush.bf16.msra.mxu0 0
    %161 = vmatpush.bf16.msra.mxu0 0
    %162 = vmatpush.bf16.msra.mxu0 %v150
    %163 = vmatpush.bf16.msra.mxu0 %v124
    %164 = vmatpush.bf16.msra.mxu0 %v121
    %165 = vmatpush.bf16.msra.mxu0 %v118
    %166 = vmatmul.bf16.gmra.mxu0 %v143
    %v167 = vpop.f32.mrf.mxu0
    %v168 = vadd.f32 0.0, %v167
    %v169 = vpop.f32.mrf.mxu0
    %v170 = vadd.f32 0.0, %v169
    %171 = vmatmul.bf16.gmra.mxu0 %v146
    %v172 = vpop.f32.mrf.mxu0
    %v173 = vadd.f32 0.0, %v172
    %v174 = vpop.f32.mrf.mxu0
    %175 = vdwg.mxu0
    %176 = vmatpush.bf16.msra.mxu0 0
    %177 = vmatpush.bf16.msra.mxu0 0
    %178 = vmatpush.bf16.msra.mxu0 0
    %179 = vmatpush.bf16.msra.mxu0 0
    %180 = vmatpush.bf16.msra.mxu0 %v153
    %181 = vmatpush.bf16.msra.mxu0 %v125
    %182 = vmatpush.bf16.msra.mxu0 %v122
    %183 = vmatpush.bf16.msra.mxu0 %v119
    %184 = vmatmul.bf16.gmra.mxu0 %v143
    %v185 = vpop.f32.mrf.mxu0
    %v186 = vadd.f32 0.0, %v185
    %v187 = vpop.f32.mrf.mxu0
    %v188 = vadd.f32 0.0, %v187
    %189 = vmatmul.bf16.gmra.mxu0 %v146
    %v190 = vpop.f32.mrf.mxu0
    %v191 = vadd.f32 0.0, %v190
    %v192 = vpop.f32.mrf.mxu0
    %193 = vdwg.mxu0
    %194 = vmatpush.bf16.msra.mxu0 0
    %195 = vmatpush.bf16.msra.mxu0 0
    %196 = vmatpush.bf16.msra.mxu0 0
    %197 = vmatpush.bf16.msra.mxu0 0
    %198 = vmatpush.bf16.msra.mxu0 %v156
    %199 = vmatpush.bf16.msra.mxu0 %v126
    %200 = vmatpush.bf16.msra.mxu0 %v123
    %201 = vmatpush.bf16.msra.mxu0 %v120
    %202 = vmatmul.bf16.gmra.mxu0 %v143
    %v203 = vpop.f32.mrf.mxu0
    %v204 = vadd.f32 0.0, %v203
    %v205 = vpop.f32.mrf.mxu0
    %v206 = vadd.f32 0.0, %v205
    %207 = vmatmul.bf16.gmra.mxu0 %v146
    %v208 = vpop.f32.mrf.mxu0
    %v209 = vadd.f32 0.0, %v208
    %v210 = vpop.f32.mrf.mxu0
    %211 = vdwg.mxu0
    %v212 = vadd.f32 %v168, %v170
    %v213 = vadd.f32 %v186, %v188
    %v214 = vadd.f32 %v204, %v206
    %v215 = vadd.f32 %v212, %v173
    %v216 = vadd.f32 %v213, %v191
    %v217 = vadd.f32 %v214, %v209
    %218 = vst [vmem:[#allocation7] sm:$0xff] %v215
    %219 = vst [vmem:[#allocation7 + $0x8] sm:$0xff] %v216
    %220 = vst [vmem:[#allocation7 + $0x10] sm:$0xff] %v217
    // Predicated region
    $region18: #{tpu_custom_call.1} parent=1 // pred_check
      _
    $region19: #{tpu_custom_call.1} parent=1 // pred_check_branch
      %222 = sbr.rel (0) target = $region21
    $region20: #{tpu_custom_call.1} parent=1 // pred_region
      %224 = vsyncadd [#allocation4], 0
      %s226 = sshll.u32 [#allocation7], 4
      %s227 = int_to_ptr.vmem [resolvable:$true] %s226
      %s228 = sshll.u32 %s2, 4
      %s229 = int_to_ptr.hbm [resolvable:$true] %s228
      %231 = dma.vmem_to_hbm [thread:$0]  %s227, 384, %s229, [#allocation4]
    $region21: #{tpu_custom_call.1} parent=1 // pred_fallthru
      _
    // Predicated region
    $region22: #{tpu_custom_call.1} parent=1 // pred_check
      _
    $region23: #{tpu_custom_call.1} parent=1 // pred_check_branch
      %233 = sbr.rel (0) target = $region25
    $region24: #{tpu_custom_call.1} parent=1 // pred_region
      %235 = dma.done [#allocation4], 384
    $region25: #{tpu_custom_call.1} parent=1 // pred_fallthru
      _
    %236 = vsyncpa [#allocation3], 1
    %237 = vsyncpa [#allocation6], 1
    %238 = vsyncpa [#allocation4], 1

</llo_original>
